<compile_context>
chip_gen: v7x
topology: tpu7x:2x2x1
jax: 0.10.0
libtpu: 0.0.40
codegen_flags: <defaults>
</compile_context>

<pallas_src>
import functools

import jax
import jax.numpy as jnp
from jax.experimental import pallas as pl
from jax.experimental.pallas import tpu as pltpu

GAMMA = 2.0  # statically 2.0 -> squared, not pow


def _pick_vmem_limit():
    """Per-generation VMEM budget: ~half physical VMEM, capped; 32 MiB fallback."""
    try:
        info = pltpu.get_tpu_info()
        for attr in ("vmem_capacity_bytes", "vmem_size_bytes", "vmem_bytes"):
            cap = getattr(info, attr, None)
            if cap:
                return int(min(int(cap) // 2, 100 * 1024 * 1024))
    except Exception:
        pass
    return 32 * 1024 * 1024


def _choose_tile(c, vmem_limit_bytes):
    """Largest sample-tile T such that the working set stays inside the budget.

    A [T, C] f32 block occupies T * lane_pad * 4 bytes of VMEM (lanes pad to
    128).  Headroom ~12x covers: 2x double-buffered logits blocks, 2x targets
    blocks, the [T, 1] accumulator scratch and ~5-6 [T, C] f32 intermediates.
    """
    lane_pad = ((c + 127) // 128) * 128
    bytes_per_row = lane_pad * 4
    headroom = 12
    t = vmem_limit_bytes // (bytes_per_row * headroom)
    return max(8, (t // 8) * 8)


def _focal_loss_kernel(logits_ref, targets_ref, alpha_ref, out_ref, acc_ref, *, n_true):
    """One [T, C] sample-tile of focal loss in the natural (row-major) layout.

    logits_ref : [T, C]   (samples on sublanes, classes on lanes)
    targets_ref: [T, 1]   int32
    alpha_ref  : [1, C]   float32
    out_ref    : [1,1,1]  float32, per-core partial (already scaled by 1/N)
    acc_ref    : [T, 1]   float32 VMEM scratch, per-sample partial sums
    """
    core = pl.program_id(0)
    step = pl.program_id(1)
    steps_per_core = pl.num_programs(1)

    @pl.when(step == 0)
    def _init():
        acc_ref[...] = jnp.zeros_like(acc_ref)

    logits = logits_ref[...].astype(jnp.float32)        # [T, C]
    tgt = targets_ref[...]                              # [T, 1] int32
    alpha = alpha_ref[...].astype(jnp.float32)          # [1, C]

    t, c = logits.shape

    # Numerically stable log-sum-exp pieces; class axis = lane axis.
    m = jnp.max(logits, axis=1, keepdims=True)                      # [T, 1]
    e = jnp.exp(logits - m)                                         # [T, C] (EUP)
    sumexp = jnp.sum(e, axis=1, keepdims=True)                      # [T, 1]

    # One-hot gather of the target class via compare + masked sum (VPU, no MXU).
    class_ids = jax.lax.broadcasted_iota(jnp.int32, (t, c), 1)      # [T, C]
    onehot = (class_ids == tgt).astype(jnp.float32)                 # [T, C]

    logit_t = jnp.sum(onehot * logits, axis=1, keepdims=True)       # [T, 1]
    alpha_t = jnp.sum(onehot * alpha, axis=1, keepdims=True)        # [T, 1]

    ce = (m + jnp.log(sumexp)) - logit_t                            # cross-entropy
    pt = jnp.exp(-ce)                                               # [T, 1]

    one_minus_pt = 1.0 - pt
    focal = alpha_t * (one_minus_pt * one_minus_pt) * ce            # gamma == 2.0

    # Mask rows past the true N (ragged last block / clamped OOB blocks carry
    # unspecified data -> must be zeroed AFTER focal is computed).
    row = jax.lax.broadcasted_iota(jnp.int32, (t, 1), 0)
    global_row = (core * steps_per_core + step) * t + row
    focal = jnp.where(global_row < n_true, focal, 0.0)

    # Plain VPU add per step; the cross-sublane reduce happens only at the end.
    acc_ref[...] += focal

    @pl.when(step == steps_per_core - 1)
    def _finalize():
        partial = jnp.sum(acc_ref[...], keepdims=True)              # [1, 1]
        out_ref[...] = (partial * jnp.float32(1.0 / n_true)).reshape(1, 1, 1)


def focal_loss(logits, targets, alpha, *, tile_n=None, num_cores=2,
               vmem_limit_bytes=None):
    """logits: [N, C] float, targets: [N] int, alpha: [C] float. Returns scalar f32."""
    n, c = logits.shape

    # Natural-layout inputs; only the tiny targets/alpha arrays get reshaped.
    targets_2d = targets.astype(jnp.int32).reshape(n, 1)     # [N, 1]
    alpha_2d = alpha.astype(jnp.float32).reshape(1, c)       # [1, C]

    if vmem_limit_bytes is None:
        vmem_limit_bytes = _pick_vmem_limit()
    if tile_n is None:
        tile_n = _choose_tile(c, vmem_limit_bytes)

    if n <= tile_n:
        tile = n                         # single block (block == full dim is legal)
    else:
        tile = max(8, (tile_n // 8) * 8)  # sublane multiple; last block is ragged

    n_blocks = -(-n // tile)
    cores = max(1, min(int(num_cores), n_blocks))
    tiles_per_core = -(-n_blocks // cores)

    def blk(core, step):
        # Clamp so a core's trailing (empty) step never indexes past the array;
        # the in-kernel global_row mask zeroes its contribution.
        return jnp.minimum(core * tiles_per_core + step, n_blocks - 1)

    kernel = functools.partial(_focal_loss_kernel, n_true=n)

    partials = pl.pallas_call(
        kernel,
        out_shape=jax.ShapeDtypeStruct((cores, 1, 1), jnp.float32),
        grid=(cores, tiles_per_core),
        in_specs=[
            pl.BlockSpec((tile, c), lambda core, step: (blk(core, step), 0)),  # logits
            pl.BlockSpec((tile, 1), lambda core, step: (blk(core, step), 0)),  # targets
            pl.BlockSpec((1, c), lambda core, step: (0, 0)),                   # alpha
        ],
        out_specs=pl.BlockSpec((1, 1, 1), lambda core, step: (core, 0, 0)),
        scratch_shapes=[pltpu.VMEM((tile, 1), jnp.float32)],
        compiler_params=pltpu.CompilerParams(
            dimension_semantics=("parallel", "arbitrary"),
            vmem_limit_bytes=int(vmem_limit_bytes),
        ),
    )(logits, targets_2d, alpha_2d)

    # Each per-core partial already carries the 1/N factor; sum across cores.
    return jnp.sum(partials)


def _focal_loss_ref(logits, targets, alpha, gamma=GAMMA):
    """Pure-JAX reference mirroring the PyTorch module (reduction='mean')."""
    logits = logits.astype(jnp.float32)
    lse = jax.scipy.special.logsumexp(logits, axis=-1)
    logit_t = jnp.take_along_axis(logits, targets[:, None], axis=-1)[:, 0]
    ce = lse - logit_t
    pt = jnp.exp(-ce)
    a = alpha[targets]
    return jnp.mean(a * (1.0 - pt) ** gamma * ce)


if __name__ == "__main__":
    key = jax.random.PRNGKey(0)
    k1, k2, k3, k4 = jax.random.split(key, 4)

    # Case 1: module defaults — binary classification, alpha=[1, 1], N=8, C=2.
    N, C = 8, 2
    logits = jax.random.normal(k1, (N, C), dtype=jnp.float32)
    targets = jax.random.randint(k2, (N,), 0, C, dtype=jnp.int32)
    alpha = jnp.array([1.0, 1.0], dtype=jnp.float32)

    loss = jax.block_until_ready(focal_loss(logits, targets, alpha))
    ref = _focal_loss_ref(logits, targets, alpha)
    assert jnp.allclose(loss, ref, rtol=1e-5, atol=1e-6), (loss, ref)

    # Case 2: exercises the multi-tile grid, ragged last block (no wrapper pad),
    # the clamped out-of-range block, the 2-core partial accumulators, and
    # non-trivial class weights (N=300, tile=128 -> 3 blocks over 2 cores).
    N2, C2 = 300, 4
    logits2 = jax.random.normal(k3, (N2, C2), dtype=jnp.float32)
    targets2 = jax.random.randint(k4, (N2,), 0, C2, dtype=jnp.int32)
    alpha2 = jnp.array([0.25, 0.75, 1.0, 2.0], dtype=jnp.float32)

    loss2 = jax.block_until_ready(
        focal_loss(logits2, targets2, alpha2, tile_n=128, num_cores=2))
    ref2 = _focal_loss_ref(logits2, targets2, alpha2)
    assert jnp.allclose(loss2, ref2, rtol=1e-5, atol=1e-6), (loss2, ref2)

    # Case 3: same data through the default (auto-sized, single-block) path.
    loss2b = jax.block_until_ready(focal_loss(logits2, targets2, alpha2))
    assert jnp.allclose(loss2b, ref2, rtol=1e-5, atol=1e-6), (loss2b, ref2)

    print("KERNEL_OK")
</pallas_src>

<mosaic_0001>
module attributes {stable_mosaic.version = 11 : i64} {
  func.func @_focal_loss_kernel(%arg0: i32, %arg1: i32, %arg2: memref<8x2xf32, #tpu.memory_space<vmem>>, %arg3: memref<8x1xi32, #tpu.memory_space<vmem>>, %arg4: memref<1x2xf32, #tpu.memory_space<vmem>>, %arg5: memref<1x1x1xf32, #tpu.memory_space<vmem>>, %arg6: memref<8x1xf32, #tpu.memory_space<vmem>>) attributes {dimension_semantics = [#tpu.dimension_semantics<parallel>, #tpu.dimension_semantics<arbitrary>], iteration_bounds = array<i64: 1, 1>, scalar_prefetch = 0 : i64, scratch_operands = 1 : i64, tpu.core_type = #tpu.core_type<tc>, window_params = [{transform_indices = @transform_0, window_bounds = array<i64: 8, 2>}, {transform_indices = @transform_1, window_bounds = array<i64: 8, 1>}, {pipeline_mode = #tpu.pipeline_mode<synchronous>, transform_indices = @transform_2, window_bounds = array<i64: 1, 2>}, {transform_indices = @transform_3, window_bounds = array<i64: 1, 1, 1>}]} {
    %c0_i32 = arith.constant 0 : i32
    %0 = arith.cmpi eq, %arg1, %c0_i32 : i32
    %1 = arith.extui %0 : i1 to i32
    %c0_i32_0 = arith.constant 0 : i32
    %2 = arith.cmpi ne, %1, %c0_i32_0 : i32
    scf.if %2 {
      %cst_19 = arith.constant 0.000000e+00 : f32
      %52 = vector.broadcast %cst_19 : f32 to vector<8x1xf32>
      %c0_20 = arith.constant 0 : index
      %c0_21 = arith.constant 0 : index
      %53 = vector.load %arg6[%c0_20, %c0_21] : memref<8x1xf32, #tpu.memory_space<vmem>>, vector<8x1xf32>
      tpu.vector_store %arg6[%c0_20, %c0_21], %52 {strides = array<i32>} : memref<8x1xf32, #tpu.memory_space<vmem>>, vector<8x1xf32>,
    } else {
    }
    %c0 = arith.constant 0 : index
    %c0_1 = arith.constant 0 : index
    %3 = vector.load %arg2[%c0, %c0_1] : memref<8x2xf32, #tpu.memory_space<vmem>>, vector<8x2xf32>
    %c0_2 = arith.constant 0 : index
    %c0_3 = arith.constant 0 : index
    %4 = vector.load %arg3[%c0_2, %c0_3] : memref<8x1xi32, #tpu.memory_space<vmem>>, vector<8x1xi32>
    %c0_4 = arith.constant 0 : index
    %c0_5 = arith.constant 0 : index
    %5 = vector.load %arg4[%c0_4, %c0_5] : memref<1x2xf32, #tpu.memory_space<vmem>>, vector<1x2xf32>
    %cst = arith.constant dense<0xFF800000> : vector<8xf32>
    %6 = vector.multi_reduction <maximumf>, %3, %cst [1] : vector<8x2xf32> to vector<8xf32>
    %7 = vector.shape_cast %6 : vector<8xf32> to vector<8x1xf32>
    %8 = vector.broadcast %7 : vector<8x1xf32> to vector<8x2xf32>
    %9 = arith.subf %3, %8 : vector<8x2xf32>
    %10 = math.exp %9 : vector<8x2xf32>
    %cst_6 = arith.constant dense<0.000000e+00> : vector<8xf32>
    %11 = vector.multi_reduction <add>, %10, %cst_6 [1] : vector<8x2xf32> to vector<8xf32>
    %12 = vector.shape_cast %11 : vector<8xf32> to vector<8x1xf32>
    %13 = tpu.iota {dimensions = array<i32: 1>} : vector<8x2xi32>
    %14 = vector.broadcast %4 : vector<8x1xi32> to vector<8x2xi32>
    %15 = arith.cmpi eq, %13, %14 : vector<8x2xi32>
    %16 = arith.extui %15 : vector<8x2xi1> to vector<8x2xi32>
    %17 = arith.sitofp %16 : vector<8x2xi32> to vector<8x2xf32>
    %18 = arith.mulf %17, %3 : vector<8x2xf32>
    %cst_7 = arith.constant dense<0.000000e+00> : vector<8xf32>
    %19 = vector.multi_reduction <add>, %18, %cst_7 [1] : vector<8x2xf32> to vector<8xf32>
    %20 = vector.shape_cast %19 : vector<8xf32> to vector<8x1xf32>
    %21 = vector.broadcast %5 : vector<1x2xf32> to vector<8x2xf32>
    %22 = arith.mulf %17, %21 : vector<8x2xf32>
    %cst_8 = arith.constant dense<0.000000e+00> : vector<8xf32>
    %23 = vector.multi_reduction <add>, %22, %cst_8 [1] : vector<8x2xf32> to vector<8xf32>
    %24 = vector.shape_cast %23 : vector<8xf32> to vector<8x1xf32>
    %25 = math.log %12 : vector<8x1xf32>
    %26 = arith.addf %7, %25 : vector<8x1xf32>
    %27 = arith.subf %26, %20 : vector<8x1xf32>
    %cst_9 = arith.constant 0.000000e+00 : f32
    %28 = vector.broadcast %cst_9 : f32 to vector<8x1xf32>
    %29 = arith.subf %28, %27 : vector<8x1xf32>
    %30 = math.exp %29 : vector<8x1xf32>
    %cst_10 = arith.constant 1.000000e+00 : f32
    %31 = vector.broadcast %cst_10 : f32 to vector<8x1xf32>
    %32 = arith.subf %31, %30 : vector<8x1xf32>
    %33 = arith.mulf %32, %32 : vector<8x1xf32>
    %34 = arith.mulf %24, %33 : vector<8x1xf32>
    %35 = arith.mulf %34, %27 : vector<8x1xf32>
    %36 = tpu.iota {dimensions = array<i32: 0>} : vector<8x1xi32>
    %c1_i32 = arith.constant 1 : i32
    %37 = arith.muli %arg0, %c1_i32 : i32
    %38 = arith.addi %37, %arg1 : i32
    %c8_i32 = arith.constant 8 : i32
    %39 = arith.muli %38, %c8_i32 : i32
    %40 = vector.broadcast %39 : i32 to vector<8x1xi32>
    %41 = arith.addi %40, %36 : vector<8x1xi32>
    %c8_i32_11 = arith.constant 8 : i32
    %42 = vector.broadcast %c8_i32_11 : i32 to vector<8x1xi32>
    %43 = arith.cmpi slt, %41, %42 : vector<8x1xi32>
    %cst_12 = arith.constant 0.000000e+00 : f32
    %44 = vector.broadcast %cst_12 : f32 to vector<8x1xf32>
    %45 = arith.select %43, %35, %44 : vector<8x1xi1>, vector<8x1xf32>
    %c0_13 = arith.constant 0 : index
    %c0_14 = arith.constant 0 : index
    %46 = vector.load %arg6[%c0_13, %c0_14] : memref<8x1xf32, #tpu.memory_space<vmem>>, vector<8x1xf32>
    %47 = arith.addf %46, %45 : vector<8x1xf32>
    %c0_15 = arith.constant 0 : index
    %c0_16 = arith.constant 0 : index
    %48 = vector.load %arg6[%c0_15, %c0_16] : memref<8x1xf32, #tpu.memory_space<vmem>>, vector<8x1xf32>
    tpu.vector_store %arg6[%c0_15, %c0_16], %47 {strides = array<i32>} : memref<8x1xf32, #tpu.memory_space<vmem>>, vector<8x1xf32>,
    %c0_i32_17 = arith.constant 0 : i32
    %49 = arith.cmpi eq, %arg1, %c0_i32_17 : i32
    %50 = arith.extui %49 : i1 to i32
    %c0_i32_18 = arith.constant 0 : i32
    %51 = arith.cmpi ne, %50, %c0_i32_18 : i32
    scf.if %51 {
      %c0_19 = arith.constant 0 : index
      %c0_20 = arith.constant 0 : index
      %52 = vector.load %arg6[%c0_19, %c0_20] : memref<8x1xf32, #tpu.memory_space<vmem>>, vector<8x1xf32>
      %53 = vector.shape_cast %52 : vector<8x1xf32> to vector<1x8x1xf32>
      %cst_21 = arith.constant dense<0.000000e+00> : vector<1xf32>
      %54 = vector.multi_reduction <add>, %53, %cst_21 [1, 2] : vector<1x8x1xf32> to vector<1xf32>
      %55 = vector.shape_cast %54 : vector<1xf32> to vector<1x1x1xf32>
      %56 = vector.extract %55[0, 0, 0] : f32 from vector<1x1x1xf32>
      %57 = vector.broadcast %56 : f32 to vector<1x1xf32>
      %cst_22 = arith.constant 1.250000e-01 : f32
      %58 = vector.broadcast %cst_22 : f32 to vector<1x1xf32>
      %59 = arith.mulf %57, %58 : vector<1x1xf32>
      %60 = vector.shape_cast %59 : vector<1x1xf32> to vector<1x1x1xf32>
      %c0_23 = arith.constant 0 : index
      %c0_24 = arith.constant 0 : index
      %c0_25 = arith.constant 0 : index
      %61 = vector.load %arg5[%c0_23, %c0_24, %c0_25] : memref<1x1x1xf32, #tpu.memory_space<vmem>>, vector<1x1x1xf32>
      tpu.vector_store %arg5[%c0_23, %c0_24, %c0_25], %60 {strides = array<i32>} : memref<1x1x1xf32, #tpu.memory_space<vmem>>, vector<1x1x1xf32>,
    } else {
    }
    return
  }
  func.func @transform_0(%arg0: i32, %arg1: i32) -> (i32, i32) {
    %c1_i32 = arith.constant 1 : i32
    %0 = arith.muli %arg0, %c1_i32 : i32
    %1 = arith.addi %0, %arg1 : i32
    %c0_i32 = arith.constant 0 : i32
    %2 = arith.minsi %1, %c0_i32 : i32
    %c0_i32_0 = arith.constant 0 : i32
    %c0_i32_1 = arith.constant 0 : i32
    return %2, %c0_i32_0 : i32, i32
  }
  func.func @transform_1(%arg0: i32, %arg1: i32) -> (i32, i32) {
    %c1_i32 = arith.constant 1 : i32
    %0 = arith.muli %arg0, %c1_i32 : i32
    %1 = arith.addi %0, %arg1 : i32
    %c0_i32 = arith.constant 0 : i32
    %2 = arith.minsi %1, %c0_i32 : i32
    %c0_i32_0 = arith.constant 0 : i32
    %c0_i32_1 = arith.constant 0 : i32
    return %2, %c0_i32_0 : i32, i32
  }
  func.func @transform_2(%arg0: i32, %arg1: i32) -> (i32, i32) {
    %c0_i32 = arith.constant 0 : i32
    %c0_i32_0 = arith.constant 0 : i32
    %c0_i32_1 = arith.constant 0 : i32
    return %c0_i32, %c0_i32_0 : i32, i32
  }
  func.func @transform_3(%arg0: i32, %arg1: i32) -> (i32, i32, i32) {
    %c0_i32 = arith.constant 0 : i32
    %c0_i32_0 = arith.constant 0 : i32
    %c0_i32_1 = arith.constant 0 : i32
    return %arg0, %c0_i32, %c0_i32_0 : i32, i32, i32
  }
}

</mosaic_0001>

<llo_original>
// kernel: tpu_custom_call.1
$region0: #{tpu_custom_call.1}
  #allocation0 [shape = 'u32[]', space=smem, size = 0x4, offset = 0x4, fixed_abs, tag = 'smem constant byte address 0x4 - core index']
  #allocation1 [shape = 'u32[144,128]{1,0:T(1,128)}', space=vmem, size = 0x12000, scoped, tag = 'internal scratch']
  #allocation2 [shape = 'f32[8,1]{1,0:T(8,128)}', space=vmem, size = 0x1000, scoped, tag = 'scratch operand']
  %s0 = inlined_call_operand.vmem [shape: f32[8,2], index: 0, kind: input, shape index: {}]
  %s1 = inlined_call_operand.vmem [shape: s32[8,1], index: 1, kind: input, shape index: {}]
  %s2 = inlined_call_operand.vmem [shape: f32[1,2], index: 2, kind: input, shape index: {}]
  %s3 = inlined_call_operand.hbm [shape: f32[1,1,1], index: 3, kind: output, shape index: {}]
  %s4 = sld [smem:[#allocation0]]
  $region30: #{tpu_custom_call.1} parent=0
    _
  %s6 = ssub.s32 1, %s4
  %s7 = scalar_select 0, %s6, %s4
  $region1: #{tpu_custom_call.1} parent=0
    #allocation3 [shape = 'u8[512]{0}', space=vmem, size = 0x400, scoped, tag = 'output window, operand 0, single buffered']
    #allocation4 [shape = 's32[1]{0}', space=sflag, size = 0x4, scoped, tag = 'scoped memory for tpu_custom_call.1']
    %8 = vsyncpa [#allocation4], 0
    // Predicated region
    $region2: #{tpu_custom_call.1} parent=1 // pred_check
      _
    $region3: #{tpu_custom_call.1} parent=1 // pred_check_branch
      %10 = sbr.rel (0) target = $region5
    $region4: #{tpu_custom_call.1} parent=1 // pred_region
      %s11 = sadd.s32 0, 0
      %p12 = scmp.lt.s32.totalorder %s11, 0
      %s13 = scalar_select %p12, %s11, 0
      %p14 = scmp.lt.s32.totalorder %s13, 0
      %s15 = scalar_select %p14, %s13, 0
      %s16 = smul.addr %s15, 8
      %s17 = scalar_lea.vmem %s0, %s16
      %s18 = sadd.s32 0, 0
      %p19 = scmp.lt.s32.totalorder %s18, 0
      %s20 = scalar_select %p19, %s18, 0
    $region5: #{tpu_custom_call.1} parent=1 // pred_fallthru
      _
    // Predicated region
    $region6: #{tpu_custom_call.1} parent=1 // pred_check
      _
    $region7: #{tpu_custom_call.1} parent=1 // pred_check_branch
      %22 = sbr.rel (0) target = $region9
    $region8: #{tpu_custom_call.1} parent=1 // pred_region
      %s23 = sadd.s32 0, 0
      %p24 = scmp.lt.s32.totalorder %s23, 0
      %s25 = scalar_select %p24, %s23, 0
      %p26 = scmp.lt.s32.totalorder %s25, 0
      %s27 = scalar_select %p26, %s25, 0
      %s28 = smul.addr %s27, 8
      %s29 = scalar_lea.vmem %s1, %s28
      %s30 = sadd.s32 0, 0
      %p31 = scmp.lt.s32.totalorder %s30, 0
      %s32 = scalar_select %p31, %s30, 0
    $region9: #{tpu_custom_call.1} parent=1 // pred_fallthru
      _
    // Predicated region
    $region10: #{tpu_custom_call.1} parent=1 // pred_check
      _
    $region11: #{tpu_custom_call.1} parent=1 // pred_check_branch
      %34 = sbr.rel (0) target = $region13
    $region12: #{tpu_custom_call.1} parent=1 // pred_region
      _
    $region13: #{tpu_custom_call.1} parent=1 // pred_fallthru
      _
    %s35 = sadd.s32 0, 0
    %p36 = scmp.lt.s32.totalorder %s35, 0
    %s37 = scalar_select %p36, %s35, 0
    %p38 = scmp.lt.s32.totalorder %s37, 0
    %s39 = scalar_select %p38, %s37, 0
    %s40 = smul.addr %s39, 8
    %s41 = scalar_lea.vmem %s0, %s40
    %s42 = sadd.s32 0, 0
    %p43 = scmp.lt.s32.totalorder %s42, 0
    %s44 = scalar_select %p43, %s42, 0
    %p45 = scmp.lt.s32.totalorder %s44, 0
    %s46 = scalar_select %p45, %s44, 0
    %s47 = smul.addr %s46, 8
    %s48 = scalar_lea.vmem %s1, %s47
    %s49 = sadd.s32 0, 0
    %p50 = scmp.lt.s32.totalorder %s49, 0
    %s51 = scalar_select %p50, %s49, 0
    %p52 = scmp.lt.s32.totalorder %s51, 0
    %s53 = scalar_select %p52, %s51, 0
    %s54 = smul.addr %s53, 8
    %s55 = scalar_lea.vmem %s0, %s54
    %s56 = sadd.s32 0, 0
    %p57 = scmp.lt.s32.totalorder %s56, 0
    %s58 = scalar_select %p57, %s56, 0
    %s59 = sadd.s32 0, 0
    %p60 = scmp.lt.s32.totalorder %s59, 0
    %s61 = scalar_select %p60, %s59, 0
    %p62 = scmp.lt.s32.totalorder %s61, 0
    %s63 = scalar_select %p62, %s61, 0
    %s64 = smul.addr %s63, 8
    %s65 = scalar_lea.vmem %s1, %s64
    %s66 = sadd.s32 0, 0
    %p67 = scmp.lt.s32.totalorder %s66, 0
    %s68 = scalar_select %p67, %s66, 0
    %p69 = scmp.eq.s32.totalorder 0, 0
    // Predicated region
    $region14: #{tpu_custom_call.1} parent=1 // pred_check
      %p70 = pneg %p69
    $region15: #{tpu_custom_call.1} parent=1 // pred_check_branch
      %72 = sbr.rel (%p70) target = $region17
    $region16: #{tpu_custom_call.1} parent=1 // pred_region
      %vm73 = vcmask 7168
      %74 = vst.msk [vmem:[#allocation2] sm:$0xff] %vm73, 0.0
    $region17: #{tpu_custom_call.1} parent=1 // pred_fallthru
      _
    %v75 = vld [vmem:[%s55] sm:$0xff]
    %v76 = vld [vmem:[%s65] sm:$0xff]
    %v77 = vld [vmem:[%s2] sm:$0x1]
    %vm78 = vcmask 15360
    %v79 = vsel %vm78, %v75, -inf
    %80 = vmax.xlane.f32.xlu0 %v79
    %v81 = vpop.xlane.xlu0 %80
    %v82 = vsub.f32 %v75, %v81
    %v83 = vmul.f32 %v82, 1.442695
    %v84 = vpow.pop %v83
    %v85 = vsel %vm78, %v84, 0.0
    %86 = vadd.xlane.f32.xlu0 %v85
    %v87 = vpop.xlane.xlu0 %86
    %v88 = vlaneseq
    %v89 = vand.u32 %v88, 127
    %90 = vset.pattern.permute.xlu0 0
    %91 = vperm.xlu0 %90, %v76
    %v92 = vpop.permute.xlu0 %91
    %vm93 = vcmp.eq.s32.totalorder %v89, %v92
    %v94 = vsel %vm93, 1, 0
    %v95 = vcvt.s32.f32 %v94
    %v96 = vmul.f32 %v95, %v75
    %v97 = vsel %vm78, %v96, 0.0
    %98 = vadd.xlane.f32.xlu0 %v97
    %v99 = vpop.xlane.xlu0 %98
    %v101 = vlaneseq
    %v102 = vshrl.u32 %v101, 7
    %v103 = vsub.s32 0, %v102
    %v104 = vrot.slane %v77, %v103
    %v106 = vmul.f32 %v95, %v104
    %v107 = vsel %vm78, %v106, 0.0
    %108 = vadd.xlane.f32.xlu0 %v107
    %v109 = vpop.xlane.xlu0 %108
    %v110 = vlog2.pop %v87
    %v111 = vmul.f32 %v110, 0.6931472
    %v112 = vadd.f32 %v81, %v111
    %v113 = vsub.f32 %v112, %v99
    %v114 = vsub.f32 0.0, %v113
    %v115 = vmul.f32 %v114, 1.442695
    %v116 = vpow.pop %v115
    %v117 = vsub.f32 1.0, %v116
    %v118 = vmul.f32 %v117, %v117
    %v119 = vmul.f32 %v109, %v118
    %v120 = vmul.f32 %v119, %v113
    %v121 = vlaneseq
    %v122 = vshrl.u32 %v121, 7
    %s123 = sadd.s32 0, 0
    %s124 = smul.u32 %s123, 8
    %v125 = vstv %s124
    %v126 = vadd.s32 %v125, %v122
    %vm127 = vcmp.lt.s32.totalorder %v126, 8
    %v128 = vsel %vm127, %v120, 0.0
    %v129 = vld [vmem:[#allocation2] sm:$0xff]
    %v130 = vadd.f32 %v129, %v128
    %vm131 = vcmask 7168
    %132 = vst.msk [vmem:[#allocation2] sm:$0xff] %vm131, %v130
    // Predicated region
    $region18: #{tpu_custom_call.1} parent=1 // pred_check
      %p133 = pneg %p69
    $region19: #{tpu_custom_call.1} parent=1 // pred_check_branch
      %135 = sbr.rel (%p133) target = $region21
    $region20: #{tpu_custom_call.1} parent=1 // pred_region
      %v136 = vld [vmem:[#allocation2] sm:$0xff]
      %v137 = vsel %vm131, %v136, 0.0
      %138 = vadd.xlane.f32.xlu0 %v137
      %v139 = vpop.xlane.xlu0 %138
      %v140 = vrot.slane %v139, 4
      %v141 = vadd.f32 %v139, %v140
      %v142 = vrot.slane %v141, 2
      %v143 = vadd.f32 %v141, %v142
      %v144 = vrot.slane %v143, 1
      %v145 = vadd.f32 %v143, %v144
      %s146 = vtos %v145
      %v147 = vstv %s146
      %v148 = vmul.f32 %v147, 0.125
      %vm149 = vcmask 0
      %150 = vst.msk [vmem:[#allocation3] sm:$0x1] %vm149, %v148
    $region21: #{tpu_custom_call.1} parent=1 // pred_fallthru
      _
    // Predicated region
    $region22: #{tpu_custom_call.1} parent=1 // pred_check
      _
    $region23: #{tpu_custom_call.1} parent=1 // pred_check_branch
      %152 = sbr.rel (0) target = $region25
    $region24: #{tpu_custom_call.1} parent=1 // pred_region
      %s154 = ssub.s32 16, 16
      %155 = vsyncadd [#allocation4], %s154
      %s157 = sshll.u32 [#allocation3], 4
      %s158 = int_to_ptr.vmem [resolvable:$true] %s157
      %160 = dma.vmem_to_hbm [thread:$0]  %s158, 16, %s3, [#allocation4]
    $region25: #{tpu_custom_call.1} parent=1 // pred_fallthru
      _
    // Predicated region
    $region26: #{tpu_custom_call.1} parent=1 // pred_check
      _
    $region27: #{tpu_custom_call.1} parent=1 // pred_check_branch
      %162 = sbr.rel (0) target = $region29
    $region28: #{tpu_custom_call.1} parent=1 // pred_region
      %163 = dma.done [#allocation4], 16
    $region29: #{tpu_custom_call.1} parent=1 // pred_fallthru
      _
    %164 = vsyncpa [#allocation4], 1

</llo_original>
